<compile_context>
chip_gen: v5e
topology: v5e:2x2
jax: 0.10.0
libtpu: 0.0.40
codegen_flags: <defaults>
</compile_context>

<pallas_src>
import math
import jax
import jax.numpy as jnp
from jax.experimental import pallas as pl
from jax.experimental.pallas import tpu as pltpu

LN_EPS = 1e-5


def create_sin_cos_encoding(d_model, max_seq_length):
    """JAX port of the PyTorch helper: returns (max_seq_length, d_model) f32."""
    position = jnp.arange(0, max_seq_length, dtype=jnp.float32)[:, None]
    div_term = jnp.exp(
        jnp.arange(0, d_model, 2, dtype=jnp.float32) * -(math.log(10000.0) / d_model)
    )
    pe = jnp.zeros((max_seq_length, d_model), dtype=jnp.float32)
    pe = pe.at[:, 0::2].set(jnp.sin(position * div_term))
    pe = pe.at[:, 1::2].set(jnp.cos(position * div_term))
    return pe


def _embed_kernel(steps_ref, x_ref, pepos_ref, pestep_ref, mask_ref,
                  gamma_ref, beta_ref, o_ref, step_rows_ref):
    # steps_ref:     (B_pad,) int32 in SMEM (scalar prefetch)
    # x_ref:         (TB, TS, D)
    # pepos_ref:     (TS, D)            positional-encoding tile (constant over inner bi sweep)
    # pestep_ref:    (MAX_STEPS, 1, D)  VMEM-resident step-encoding table
    # mask_ref:      (TB, TS)           float mask (1.0 / 0.0), lane-dense
    # gamma/beta:    (1, D)
    # o_ref:         (TB, TS, D)
    # step_rows_ref: (TB, 1, D)         VMEM scratch for gathered step rows
    TB = x_ref.shape[0]
    b0 = pl.program_id(1) * TB          # batch axis is the INNER grid axis

    # Gather this block's per-batch step-encoding rows from the resident table
    # (dynamic index only on the leading, non-layout axis -> clean lowering).
    if TB == 1:
        step_rows = pestep_ref[steps_ref[b0]][None]       # (1, 1, D), no scratch needed
    else:
        @pl.loop(0, TB)
        def _(j):
            step_rows_ref[j] = pestep_ref[steps_ref[b0 + j]]
        step_rows = step_rows_ref[...]                    # (TB, 1, D)

    x = x_ref[...]                          # (TB, TS, D)
    pe_pos = pepos_ref[...]                 # (TS, D)
    m = mask_ref[...][..., None]            # (TB, TS, 1)  in-kernel relayout (XLU has slack)
    gamma = gamma_ref[...]                  # (1, D)
    beta = beta_ref[...]                    # (1, D)

    # Positional + masked step encoding (hot elementwise path).
    h = x + pe_pos[None] + m * step_rows    # (TB, TS, D)

    # Two-pass LayerNorm over d_model (matches the reference; no cancellation risk).
    mean = jnp.mean(h, axis=-1, keepdims=True)
    c = h - mean
    var = jnp.mean(c * c, axis=-1, keepdims=True)
    inv = jax.lax.rsqrt(var + LN_EPS)
    o_ref[...] = (c * (inv * gamma) + beta).astype(o_ref.dtype)


def _choose_tiles(B, S, D, dtype_bytes=4,
                  target_rows=4096, work_budget_bytes=36 * 1024 * 1024):
    """Pick (TB, TS).

    Working-set model: ~9x the x block (x + out double-buffered, pe_pos, mask, plus
    Mosaic temporaries for h / centered / products) must fit `work_budget_bytes`
    (kept under the explicit 48 MiB vmem_limit, which itself fits v7x's 64 MiB).

    Block-shape legality (mask is (B, S) with block (TB, TS)):
      * TS must be a multiple of 128 OR equal S.
      * TB must be a multiple of 8  OR equal B.
    """
    max_rows = max(8, work_budget_bytes // (9 * D * dtype_bytes))
    rows = min(target_rows, max_rows)

    if S <= rows:
        # Short sequences: take the full seq extent and fuse batch elements.
        ts = S
        tb_cap = max(1, rows // max(S, 1))
        if tb_cap >= B:
            tb = B                              # full batch extent (always legal)
        elif tb_cap >= 8:
            tb = (tb_cap // 8) * 8              # mask sublane dim 8-aligned
        else:
            tb = B if B <= 8 else 8             # mild overshoot beats tiny blocks
        return tb, ts

    # Long sequences: a few batch rows per block, seq tiled in 128-multiples.
    tb = 1 if B == 1 else (B if B <= 8 else 8)
    rows_per_b = max(1, rows // tb)
    ts = max(128, (rows_per_b // 128) * 128)
    ts = min(ts, S) if S % 128 == 0 else min(ts, ((S + 127) // 128) * 128)
    return tb, ts


def embedding_block_second(x, steps, mask, pe_pos_full, pe_step_full, gamma, beta):
    """x: (B, S, D) f32, steps: (B,) int, mask: (B, S) bool."""
    B, S, D = x.shape
    max_steps = pe_step_full.shape[0]
    TB, TS = _choose_tiles(B, S, D)
    grid = (pl.cdiv(S, TS), pl.cdiv(B, TB))          # seq OUTER, batch INNER

    # Pad `steps` so SMEM reads stay in-bounds for the partial edge batch block.
    B_pad = grid[1] * TB
    steps_i32 = steps.astype(jnp.int32)
    if B_pad != B:
        steps_i32 = jnp.pad(steps_i32, (0, B_pad - B))

    # Cheap wrapper-side layout glue only (no gathers; gather happens in-kernel).
    pe_pos = pe_pos_full[:S]                               # (S, D)
    pe_step_tbl = pe_step_full.reshape(max_steps, 1, D)    # resident VMEM table
    mask_f = mask.astype(x.dtype)                          # (B, S) lane-dense
    gamma2 = gamma.reshape(1, D).astype(jnp.float32)
    beta2 = beta.reshape(1, D).astype(jnp.float32)

    grid_spec = pltpu.PrefetchScalarGridSpec(
        num_scalar_prefetch=1,        # `steps` -> SMEM; visible to kernel & index_maps
        grid=grid,
        in_specs=[
            pl.BlockSpec((TB, TS, D), lambda si, bi, stp: (bi, si, 0)),      # X
            pl.BlockSpec((TS, D), lambda si, bi, stp: (si, 0)),              # pe_pos (no re-fetch across bi)
            pl.BlockSpec((max_steps, 1, D), lambda si, bi, stp: (0, 0, 0)),  # step table (resident)
            pl.BlockSpec((TB, TS), lambda si, bi, stp: (bi, si)),            # mask, lane-dense
            pl.BlockSpec((1, D), lambda si, bi, stp: (0, 0)),                # gamma
            pl.BlockSpec((1, D), lambda si, bi, stp: (0, 0)),                # beta
        ],
        out_specs=pl.BlockSpec((TB, TS, D), lambda si, bi, stp: (bi, si, 0)),
        scratch_shapes=[pltpu.VMEM((TB, 1, D), jnp.float32)],
    )

    return pl.pallas_call(
        _embed_kernel,
        out_shape=jax.ShapeDtypeStruct((B, S, D), x.dtype),
        grid_spec=grid_spec,
        compiler_params=pltpu.CompilerParams(
            dimension_semantics=("parallel", "parallel"),
            vmem_limit_bytes=48 * 1024 * 1024,
        ),
    )(steps_i32, x, pe_pos, pe_step_tbl, mask_f, gamma2, beta2)


def reference(x, steps, mask, pe_pos_full, pe_step_full, gamma, beta):
    """Pure-JAX reference matching the PyTorch forward (eval mode)."""
    x_pe = x + pe_pos_full[: x.shape[1]][None]
    x_se = x_pe + mask.astype(x.dtype)[..., None] * pe_step_full[steps][:, None, :]
    mean = jnp.mean(x_se, axis=-1, keepdims=True)
    var = jnp.mean((x_se - mean) ** 2, axis=-1, keepdims=True)
    y = (x_se - mean) / jnp.sqrt(var + LN_EPS)
    return y * gamma + beta


if __name__ == "__main__":
    # Small shapes consistent with the module's (batch, seq, d_model) contract.
    B, S, D = 2, 16, 128
    MAX_STEPS = 64
    PE_MAX_SEQ = 512   # PositionalEncoding(d_model, 512) inside EmbeddingBlockSecond

    key = jax.random.PRNGKey(0)
    kx, ksteps, kmask = jax.random.split(key, 3)

    x = jax.random.normal(kx, (B, S, D), dtype=jnp.float32)
    steps = jax.random.randint(ksteps, (B,), 0, MAX_STEPS, dtype=jnp.int32)
    mask = jax.random.bernoulli(kmask, 0.5, (B, S))

    # Deterministic parameters / buffers (LayerNorm default init: ones / zeros).
    pe_pos_full = create_sin_cos_encoding(D, PE_MAX_SEQ)     # PositionalEncoding buffer
    pe_step_full = create_sin_cos_encoding(D, MAX_STEPS)     # StepEncoding buffer
    gamma = jnp.ones((D,), dtype=jnp.float32)
    beta = jnp.zeros((D,), dtype=jnp.float32)

    out = embedding_block_second(x, steps, mask, pe_pos_full, pe_step_full, gamma, beta)
    out = jax.block_until_ready(out)

    ref = reference(x, steps, mask, pe_pos_full, pe_step_full, gamma, beta)
    assert out.shape == (B, S, D)
    assert jnp.allclose(out, ref, atol=1e-4, rtol=1e-4), "mismatch vs. JAX reference"

    print("KERNEL_OK")
</pallas_src>

<mosaic_0001>
module attributes {stable_mosaic.version = 11 : i64} {
  func.func @_embed_kernel(%arg0: i32, %arg1: i32, %arg2: memref<2xi32, #tpu.memory_space<smem>>, %arg3: memref<2x16x128xf32, #tpu.memory_space<vmem>>, %arg4: memref<16x128xf32, #tpu.memory_space<vmem>>, %arg5: memref<64x1x128xf32, #tpu.memory_space<vmem>>, %arg6: memref<2x16xf32, #tpu.memory_space<vmem>>, %arg7: memref<1x128xf32, #tpu.memory_space<vmem>>, %arg8: memref<1x128xf32, #tpu.memory_space<vmem>>, %arg9: memref<2x16x128xf32, #tpu.memory_space<vmem>>, %arg10: memref<2x1x128xf32, #tpu.memory_space<vmem>>) attributes {dimension_semantics = [#tpu.dimension_semantics<parallel>, #tpu.dimension_semantics<parallel>], iteration_bounds = array<i64: 1, 1>, scalar_prefetch = 1 : i64, scratch_operands = 1 : i64, tpu.core_type = #tpu.core_type<tc>, window_params = [{transform_indices = @transform_0, window_bounds = array<i64: 2, 16, 128>}, {transform_indices = @transform_1, window_bounds = array<i64: 16, 128>}, {pipeline_mode = #tpu.pipeline_mode<synchronous>, transform_indices = @transform_2, window_bounds = array<i64: 64, 1, 128>}, {transform_indices = @transform_3, window_bounds = array<i64: 2, 16>}, {pipeline_mode = #tpu.pipeline_mode<synchronous>, transform_indices = @transform_4, window_bounds = array<i64: 1, 128>}, {pipeline_mode = #tpu.pipeline_mode<synchronous>, transform_indices = @transform_5, window_bounds = array<i64: 1, 128>}, {transform_indices = @transform_6, window_bounds = array<i64: 2, 16, 128>}]} {
    %c2_i32 = arith.constant 2 : i32
    %0 = arith.muli %arg1, %c2_i32 : i32
    %c0_i32 = arith.constant 0 : i32
    %c2_i32_0 = arith.constant 2 : i32
    %1 = arith.addi %c0_i32, %c2_i32_0 : i32
    %c1_i32 = arith.constant 1 : i32
    scf.for %arg11 = %c0_i32 to %1 step %c1_i32  : i32 {
      %c1_i32_22 = arith.constant 1 : i32
      %39 = arith.muli %arg11, %c1_i32_22 : i32
      %c0_i32_23 = arith.constant 0 : i32
      %40 = arith.addi %c0_i32_23, %39 : i32
      %41 = arith.addi %0, %40 : i32
      %42 = arith.index_cast %41 : i32 to index
      %43 = memref.load %arg2[%42] : memref<2xi32, #tpu.memory_space<smem>>
      %44 = arith.index_cast %43 : i32 to index
      %c0_24 = arith.constant 0 : index
      %c0_25 = arith.constant 0 : index
      %45 = vector.load %arg5[%44, %c0_24, %c0_25] : memref<64x1x128xf32, #tpu.memory_space<vmem>>, vector<1x1x128xf32>
      %46 = vector.shape_cast %45 : vector<1x1x128xf32> to vector<1x128xf32>
      %47 = arith.index_cast %40 : i32 to index
      %c0_26 = arith.constant 0 : index
      %c0_27 = arith.constant 0 : index
      %48 = vector.load %arg10[%47, %c0_26, %c0_27] : memref<2x1x128xf32, #tpu.memory_space<vmem>>, vector<1x1x128xf32>
      %49 = vector.shape_cast %48 : vector<1x1x128xf32> to vector<1x128xf32>
      %50 = vector.shape_cast %46 : vector<1x128xf32> to vector<1x1x128xf32>
      tpu.vector_store %arg10[%47, %c0_26, %c0_27], %50 {strides = array<i32>} : memref<2x1x128xf32, #tpu.memory_space<vmem>>, vector<1x1x128xf32>,
    }
    %c2_i32_1 = arith.constant 2 : i32
    %c0 = arith.constant 0 : index
    %c0_2 = arith.constant 0 : index
    %c0_3 = arith.constant 0 : index
    %2 = vector.load %arg10[%c0, %c0_2, %c0_3] : memref<2x1x128xf32, #tpu.memory_space<vmem>>, vector<2x1x128xf32>
    %c0_4 = arith.constant 0 : index
    %c0_5 = arith.constant 0 : index
    %c0_6 = arith.constant 0 : index
    %3 = vector.load %arg3[%c0_4, %c0_5, %c0_6] : memref<2x16x128xf32, #tpu.memory_space<vmem>>, vector<2x16x128xf32>
    %c0_7 = arith.constant 0 : index
    %c0_8 = arith.constant 0 : index
    %4 = vector.load %arg4[%c0_7, %c0_8] : memref<16x128xf32, #tpu.memory_space<vmem>>, vector<16x128xf32>
    %c0_9 = arith.constant 0 : index
    %c0_10 = arith.constant 0 : index
    %5 = vector.load %arg6[%c0_9, %c0_10] : memref<2x16xf32, #tpu.memory_space<vmem>>, vector<2x16xf32>
    %6 = vector.shape_cast %5 : vector<2x16xf32> to vector<2x16x1xf32>
    %c0_11 = arith.constant 0 : index
    %c0_12 = arith.constant 0 : index
    %7 = vector.load %arg7[%c0_11, %c0_12] : memref<1x128xf32, #tpu.memory_space<vmem>>, vector<1x128xf32>
    %c0_13 = arith.constant 0 : index
    %c0_14 = arith.constant 0 : index
    %8 = vector.load %arg8[%c0_13, %c0_14] : memref<1x128xf32, #tpu.memory_space<vmem>>, vector<1x128xf32>
    %9 = vector.shape_cast %4 : vector<16x128xf32> to vector<1x16x128xf32>
    %10 = vector.broadcast %9 : vector<1x16x128xf32> to vector<2x16x128xf32>
    %11 = arith.addf %3, %10 : vector<2x16x128xf32>
    %12 = vector.broadcast %6 : vector<2x16x1xf32> to vector<2x16x128xf32>
    %13 = vector.broadcast %2 : vector<2x1x128xf32> to vector<2x16x128xf32>
    %14 = arith.mulf %12, %13 : vector<2x16x128xf32>
    %15 = arith.addf %11, %14 : vector<2x16x128xf32>
    %cst = arith.constant dense<0.000000e+00> : vector<2x16xf32>
    %16 = vector.multi_reduction <add>, %15, %cst [2] : vector<2x16x128xf32> to vector<2x16xf32>
    %17 = vector.shape_cast %16 : vector<2x16xf32> to vector<2x16x1xf32>
    %cst_15 = arith.constant 1.280000e+02 : f32
    %18 = vector.broadcast %cst_15 : f32 to vector<2x16x1xf32>
    %19 = arith.divf %17, %18 : vector<2x16x1xf32>
    %20 = vector.broadcast %19 : vector<2x16x1xf32> to vector<2x16x128xf32>
    %21 = arith.subf %15, %20 : vector<2x16x128xf32>
    %22 = arith.mulf %21, %21 : vector<2x16x128xf32>
    %cst_16 = arith.constant dense<0.000000e+00> : vector<2x16xf32>
    %23 = vector.multi_reduction <add>, %22, %cst_16 [2] : vector<2x16x128xf32> to vector<2x16xf32>
    %24 = vector.shape_cast %23 : vector<2x16xf32> to vector<2x16x1xf32>
    %cst_17 = arith.constant 1.280000e+02 : f32
    %25 = vector.broadcast %cst_17 : f32 to vector<2x16x1xf32>
    %26 = arith.divf %24, %25 : vector<2x16x1xf32>
    %cst_18 = arith.constant 9.99999974E-6 : f32
    %27 = vector.broadcast %cst_18 : f32 to vector<2x16x1xf32>
    %28 = arith.addf %26, %27 : vector<2x16x1xf32>
    %29 = math.rsqrt %28 : vector<2x16x1xf32>
    %30 = vector.shape_cast %7 : vector<1x128xf32> to vector<1x1x128xf32>
    %31 = vector.broadcast %29 : vector<2x16x1xf32> to vector<2x16x128xf32>
    %32 = vector.broadcast %30 : vector<1x1x128xf32> to vector<2x16x128xf32>
    %33 = arith.mulf %31, %32 : vector<2x16x128xf32>
    %34 = arith.mulf %21, %33 : vector<2x16x128xf32>
    %35 = vector.shape_cast %8 : vector<1x128xf32> to vector<1x1x128xf32>
    %36 = vector.broadcast %35 : vector<1x1x128xf32> to vector<2x16x128xf32>
    %37 = arith.addf %34, %36 : vector<2x16x128xf32>
    %c0_19 = arith.constant 0 : index
    %c0_20 = arith.constant 0 : index
    %c0_21 = arith.constant 0 : index
    %38 = vector.load %arg9[%c0_19, %c0_20, %c0_21] : memref<2x16x128xf32, #tpu.memory_space<vmem>>, vector<2x16x128xf32>
    tpu.vector_store %arg9[%c0_19, %c0_20, %c0_21], %37 {strides = array<i32>} : memref<2x16x128xf32, #tpu.memory_space<vmem>>, vector<2x16x128xf32>,
    return
  }
  func.func @transform_0(%arg0: i32, %arg1: i32, %arg2: memref<2xi32, #tpu.memory_space<smem>>) -> (i32, i32, i32) {
    %c0_i32 = arith.constant 0 : i32
    %c0_i32_0 = arith.constant 0 : i32
    return %arg1, %arg0, %c0_i32 : i32, i32, i32
  }
  func.func @transform_1(%arg0: i32, %arg1: i32, %arg2: memref<2xi32, #tpu.memory_space<smem>>) -> (i32, i32) {
    %c0_i32 = arith.constant 0 : i32
    %c0_i32_0 = arith.constant 0 : i32
    return %arg0, %c0_i32 : i32, i32
  }
  func.func @transform_2(%arg0: i32, %arg1: i32, %arg2: memref<2xi32, #tpu.memory_space<smem>>) -> (i32, i32, i32) {
    %c0_i32 = arith.constant 0 : i32
    %c0_i32_0 = arith.constant 0 : i32
    %c0_i32_1 = arith.constant 0 : i32
    %c0_i32_2 = arith.constant 0 : i32
    return %c0_i32, %c0_i32_0, %c0_i32_1 : i32, i32, i32
  }
  func.func @transform_3(%arg0: i32, %arg1: i32, %arg2: memref<2xi32, #tpu.memory_space<smem>>) -> (i32, i32) {
    %c0_i32 = arith.constant 0 : i32
    return %arg1, %arg0 : i32, i32
  }
  func.func @transform_4(%arg0: i32, %arg1: i32, %arg2: memref<2xi32, #tpu.memory_space<smem>>) -> (i32, i32) {
    %c0_i32 = arith.constant 0 : i32
    %c0_i32_0 = arith.constant 0 : i32
    %c0_i32_1 = arith.constant 0 : i32
    return %c0_i32, %c0_i32_0 : i32, i32
  }
  func.func @transform_5(%arg0: i32, %arg1: i32, %arg2: memref<2xi32, #tpu.memory_space<smem>>) -> (i32, i32) {
    %c0_i32 = arith.constant 0 : i32
    %c0_i32_0 = arith.constant 0 : i32
    %c0_i32_1 = arith.constant 0 : i32
    return %c0_i32, %c0_i32_0 : i32, i32
  }
  func.func @transform_6(%arg0: i32, %arg1: i32, %arg2: memref<2xi32, #tpu.memory_space<smem>>) -> (i32, i32, i32) {
    %c0_i32 = arith.constant 0 : i32
    %c0_i32_0 = arith.constant 0 : i32
    return %arg1, %arg0, %c0_i32 : i32, i32, i32
  }
}

</mosaic_0001>

<llo_original>
// kernel: tpu_custom_call.1
$region0: #{tpu_custom_call.1}
  #allocation0 [shape = 'u32[]', space=smem, size = 0x4, offset = 0x4, fixed_abs, tag = 'smem constant byte address 0x4 - core index']
  #allocation1 [shape = 'u32[72,128]{1,0:T(1,128)}', space=vmem, size = 0x9000, scoped, tag = 'internal scratch']
  #allocation2 [shape = 'f32[2,1,128]{2,1,0:T(1,128)}', space=vmem, size = 0x400, scoped, tag = 'scratch operand']
  #allocation3 [shape = 's32[1]{0}', space=sflag, size = 0x4, scoped, tag = 'scoped memory for tpu_custom_call.1']
  #allocation4 [shape = 'u8[512]{0}', space=smem, size = 0x200, scoped, tag = 'prefetched SMEM operand 0']
  %s0 = inlined_call_operand.hbm [shape: s32[2], index: 0, kind: input, shape index: {}]
  %s1 = inlined_call_operand.hbm [shape: f32[2,16,128], index: 1, kind: input, shape index: {}]
  %s2 = inlined_call_operand.hbm [shape: f32[16,128], index: 2, kind: input, shape index: {}]
  %s3 = inlined_call_operand.hbm [shape: f32[64,1,128], index: 3, kind: input, shape index: {}]
  %s4 = inlined_call_operand.vmem [shape: f32[2,16], index: 4, kind: input, shape index: {}]
  %s5 = inlined_call_operand.vmem [shape: f32[1,128], index: 5, kind: input, shape index: {}]
  %s6 = inlined_call_operand.vmem [shape: f32[1,128], index: 6, kind: input, shape index: {}]
  %s7 = inlined_call_operand.hbm [shape: f32[2,16,128], index: 7, kind: output, shape index: {}]
  %s8 = sld [smem:[#allocation0]]
  $region53: #{tpu_custom_call.1} parent=0
    _
  %s10 = ssub.s32 1, %s8
  %s11 = scalar_select 0, %s10, %s8
  %s13 = sshll.u32 %s0, 4
  %s14 = int_to_ptr.hbm [resolvable:$true] %s13
  %16 = dma.hbm_to_smem %s14, 16, [#allocation4], [#allocation3]
  %18 = dma.done [#allocation3], 16
  %19 = sfence
  $region1: #{tpu_custom_call.1} parent=0
    #allocation5 [shape = 'u8[16384]{0}', space=vmem, size = 0x4000, scoped, tag = 'input window, operand 1, single buffered']
    #allocation6 [shape = 's32[1]{0}', space=sflag, size = 0x4, scoped, tag = 'scoped memory for tpu_custom_call.1']
    #allocation7 [shape = 's32[1]{0}', space=sflag, size = 0x4, scoped, tag = 'scoped memory for tpu_custom_call.1']
    #allocation8 [shape = 'u8[8192]{0}', space=vmem, size = 0x2000, scoped, tag = 'input window, operand 2, single buffered']
    #allocation9 [shape = 's32[1]{0}', space=sflag, size = 0x4, scoped, tag = 'scoped memory for tpu_custom_call.1']
    #allocation10 [shape = 'u8[32768]{0}', space=vmem, size = 0x8000, scoped, tag = 'input window, operand 3, single buffered']
    #allocation11 [shape = 'u8[16384]{0}', space=vmem, size = 0x4000, scoped, tag = 'output window, operand 0, single buffered']
    %20 = vsyncpa [#allocation6], 0
    %21 = vsyncpa [#allocation9], 0
    %22 = vsyncpa [#allocation7], 0
    // Predicated region
    $region2: #{tpu_custom_call.1} parent=1 // pred_check
      _
    $region3: #{tpu_custom_call.1} parent=1 // pred_check_branch
      %24 = sbr.rel (0) target = $region5
    $region4: #{tpu_custom_call.1} parent=1 // pred_region
      %26 = vsyncadd [#allocation6], 0
      %s27 = sshll.u32 %s1, 4
      %s28 = int_to_ptr.hbm [resolvable:$true] %s27
      %s29 = sshll.u32 [#allocation5], 4
      %s30 = int_to_ptr.vmem [resolvable:$true] %s29
      %35 = dma.hbm_to_vmem [thread:$0]  %s28, 512, %s30, [#allocation6], 128, 128, 8
    $region5: #{tpu_custom_call.1} parent=1 // pred_fallthru
      _
    // Predicated region
    $region6: #{tpu_custom_call.1} parent=1 // pred_check
      _
    $region7: #{tpu_custom_call.1} parent=1 // pred_check_branch
      %37 = sbr.rel (0) target = $region9
    $region8: #{tpu_custom_call.1} parent=1 // pred_region
      %39 = vsyncadd [#allocation9], 0
      %s40 = sshll.u32 %s2, 4
      %s41 = int_to_ptr.hbm [resolvable:$true] %s40
      %s42 = sshll.u32 [#allocation8], 4
      %s43 = int_to_ptr.vmem [resolvable:$true] %s42
      %48 = dma.hbm_to_vmem [thread:$0]  %s41, 256, %s43, [#allocation9], 128, 128, 8
    $region9: #{tpu_custom_call.1} parent=1 // pred_fallthru
      _
    // Predicated region
    $region10: #{tpu_custom_call.1} parent=1 // pred_check
      _
    $region11: #{tpu_custom_call.1} parent=1 // pred_check_branch
      %50 = sbr.rel (0) target = $region13
    $region12: #{tpu_custom_call.1} parent=1 // pred_region
      %52 = vsyncadd [#allocation9], 0
      %s53 = sshll.u32 %s3, 4
      %s54 = int_to_ptr.hbm [resolvable:$true] %s53
      %s55 = sshll.u32 [#allocation10], 4
      %s56 = int_to_ptr.vmem [resolvable:$true] %s55
      %61 = dma.hbm_to_vmem [thread:$0]  %s54, 1024, %s56, [#allocation9], 16, 16, 1
    $region13: #{tpu_custom_call.1} parent=1 // pred_fallthru
      _
    // Predicated region
    $region14: #{tpu_custom_call.1} parent=1 // pred_check
      _
    $region15: #{tpu_custom_call.1} parent=1 // pred_check_branch
      %63 = sbr.rel (0) target = $region17
    $region16: #{tpu_custom_call.1} parent=1 // pred_region
      _
    $region17: #{tpu_custom_call.1} parent=1 // pred_fallthru
      _
    // Predicated region
    $region18: #{tpu_custom_call.1} parent=1 // pred_check
      _
    $region19: #{tpu_custom_call.1} parent=1 // pred_check_branch
      %65 = sbr.rel (0) target = $region21
    $region20: #{tpu_custom_call.1} parent=1 // pred_region
      _
    $region21: #{tpu_custom_call.1} parent=1 // pred_fallthru
      _
    // Predicated region
    $region22: #{tpu_custom_call.1} parent=1 // pred_check
      _
    $region23: #{tpu_custom_call.1} parent=1 // pred_check_branch
      %67 = sbr.rel (0) target = $region25
    $region24: #{tpu_custom_call.1} parent=1 // pred_region
      _
    $region25: #{tpu_custom_call.1} parent=1 // pred_fallthru
      _
    // Predicated region
    $region26: #{tpu_custom_call.1} parent=1 // pred_check
      _
    $region27: #{tpu_custom_call.1} parent=1 // pred_check_branch
      %69 = sbr.rel (0) target = $region29
    $region28: #{tpu_custom_call.1} parent=1 // pred_region
      %71 = dma.done [#allocation6], 512
    $region29: #{tpu_custom_call.1} parent=1 // pred_fallthru
      _
    // Predicated region
    $region30: #{tpu_custom_call.1} parent=1 // pred_check
      _
    $region31: #{tpu_custom_call.1} parent=1 // pred_check_branch
      %73 = sbr.rel (0) target = $region33
    $region32: #{tpu_custom_call.1} parent=1 // pred_region
      %75 = dma.done [#allocation9], 256
    $region33: #{tpu_custom_call.1} parent=1 // pred_fallthru
      _
    // Predicated region
    $region34: #{tpu_custom_call.1} parent=1 // pred_check
      _
    $region35: #{tpu_custom_call.1} parent=1 // pred_check_branch
      %77 = sbr.rel (0) target = $region37
    $region36: #{tpu_custom_call.1} parent=1 // pred_region
      %79 = dma.done [#allocation9], 1024
    $region37: #{tpu_custom_call.1} parent=1 // pred_fallthru
      _
    %s80 = smul.u32 0, 2
    loop: start=0, step=1, limit=2
    $region38: #{tpu_custom_call.1} parent=1 // loop_pre_header
      _
    $region39: #{tpu_custom_call.1} parent=1 // loop_header
      %s82 = sphi 0, %s86
      %p83 = scmp.ge.s32.totalorder %s82, 2
    $region40: #{tpu_custom_call.1} parent=1 // loop_header_branch
      %85 = sbr.rel (%p83) target = $region44
    $region41: #{tpu_custom_call.1} parent=1 // loop_body
      %s87 = sadd.s32 %s80, %s82
      %s88 = sld [smem:[#allocation4 + %s87]]
      %s89 = scalar_lea.vmem [#allocation10], %s88
      %v90 = vld [vmem:[%s89] sm:$0x1]
      %s91 = scalar_lea.vmem [#allocation2], %s82
      %92 = vst [vmem:[%s91] sm:$0x1] %v90
    $region42: #{tpu_custom_call.1} parent=1 // loop_footer
      %s86 = sadd.s32 1, %s82
    $region43: #{tpu_custom_call.1} parent=1 // loop_footer_branch
      %81 = sbr.rel target = $region39
    $region44: #{tpu_custom_call.1} parent=1 // loop_exit
      _
    %v93 = vld [vmem:[#allocation2] sm:$0x1]
    %v94 = vld [vmem:[#allocation2 + $0x1] sm:$0x1]
    %v95 = vld [vmem:[#allocation5] sm:$0xff]
    %v96 = vld [vmem:[#allocation5 + $0x8] sm:$0xff]
    %v97 = vld [vmem:[#allocation5 + $0x10] sm:$0xff]
    %v98 = vld [vmem:[#allocation5 + $0x18] sm:$0xff]
    %v99 = vld [vmem:[#allocation8] sm:$0xff]
    %v100 = vld [vmem:[#allocation8 + $0x8] sm:$0xff]
    %v101 = vld [vmem:[%s4] sm:$0x3]
    %v102 = vperm.slane %v101, 0
    %v103 = vlaneseq
    %v104 = vshrl.u32 %v103, 7
    %106 = vset.pattern.permute.xlu0 %v104
    %107 = vperm.xlu0 %106, %v102
    %v108 = vpop.permute.xlu0 %107
    %v109 = vlaneseq
    %v110 = vshrl.u32 %v109, 7
    %v111 = vadd.s32 %v110, 8
    %112 = vset.pattern.permute.xlu0 %v111
    %113 = vperm.xlu0 %112, %v102
    %v114 = vpop.permute.xlu0 %113
    %v115 = vperm.slane %v101, 1
    %v116 = vlaneseq
    %v117 = vshrl.u32 %v116, 7
    %119 = vset.pattern.permute.xlu0 %v117
    %120 = vperm.xlu0 %119, %v115
    %v121 = vpop.permute.xlu0 %120
    %v122 = vlaneseq
    %v123 = vshrl.u32 %v122, 7
    %v124 = vadd.s32 %v123, 8
    %125 = vset.pattern.permute.xlu0 %v124
    %126 = vperm.xlu0 %125, %v115
    %v127 = vpop.permute.xlu0 %126
    %v128 = vld [vmem:[%s5] sm:$0x1]
    %v129 = vld [vmem:[%s6] sm:$0x1]
    %v130 = vadd.f32 %v95, %v99
    %v131 = vadd.f32 %v96, %v100
    %v132 = vadd.f32 %v97, %v99
    %v133 = vadd.f32 %v98, %v100
    %v136 = vperm.slane %v93, 0
    %v137 = vperm.slane %v94, 0
    %v140 = vmul.f32 %v108, %v136
    %v141 = vmul.f32 %v114, %v136
    %v142 = vmul.f32 %v121, %v137
    %v143 = vmul.f32 %v127, %v137
    %v144 = vadd.f32 %v130, %v140
    %v145 = vadd.f32 %v131, %v141
    %v146 = vadd.f32 %v132, %v142
    %v147 = vadd.f32 %v133, %v143
    %148 = vadd.xlane.f32.xlu0 %v144
    %v149 = vpop.xlane.xlu0 %148
    %150 = vadd.xlane.f32.xlu0 %v145
    %v151 = vpop.xlane.xlu0 %150
    %152 = vadd.xlane.f32.xlu0 %v146
    %v153 = vpop.xlane.xlu0 %152
    %154 = vadd.xlane.f32.xlu0 %v147
    %v155 = vpop.xlane.xlu0 %154
    %v156 = vrcp.pop 128.0
    %v157 = vmul.f32 128.0, %v156
    %v158 = vsub.f32 1.0, %v157
    %v159 = vmul.f32 %v156, %v158
    %v160 = vadd.f32 %v156, %v159
    %vm161 = vweird.f32 %v156
    %v162 = vsel %vm161, %v156, %v160
    %v163 = vmul.f32 %v149, %v162
    %v164 = vmul.f32 %v151, %v162
    %v165 = vmul.f32 %v153, %v162
    %v166 = vmul.f32 %v155, %v162
    %v167 = vsub.f32 %v144, %v163
    %v168 = vsub.f32 %v145, %v164
    %v169 = vsub.f32 %v146, %v165
    %v170 = vsub.f32 %v147, %v166
    %v171 = vmul.f32 %v167, %v167
    %v172 = vmul.f32 %v168, %v168
    %v173 = vmul.f32 %v169, %v169
    %v174 = vmul.f32 %v170, %v170
    %175 = vadd.xlane.f32.xlu0 %v171
    %v176 = vpop.xlane.xlu0 %175
    %177 = vadd.xlane.f32.xlu0 %v172
    %v178 = vpop.xlane.xlu0 %177
    %179 = vadd.xlane.f32.xlu0 %v173
    %v180 = vpop.xlane.xlu0 %179
    %181 = vadd.xlane.f32.xlu0 %v174
    %v182 = vpop.xlane.xlu0 %181
    %v183 = vmul.f32 %v176, %v162
    %v184 = vmul.f32 %v178, %v162
    %v185 = vmul.f32 %v180, %v162
    %v186 = vmul.f32 %v182, %v162
    %v187 = vadd.f32 %v183, 1e-05
    %v188 = vadd.f32 %v184, 1e-05
    %v189 = vadd.f32 %v185, 1e-05
    %v190 = vadd.f32 %v186, 1e-05
    %v191 = vrsqrt.pop %v187
    %v192 = vmul.f32 %v191, %v187
    %v193 = vmul.f32 %v192, %v191
    %v194 = vmul.f32 0.5, %v193
    %v195 = vsub.f32 1.5, %v194
    %v196 = vmul.f32 %v191, %v195
    %vm197 = vweird.f32 %v187
    %vm198 = vweird.f32 %v191
    %vm199 = vmor %vm197, %vm198
    %v200 = vsel %vm199, %v191, %v196
    %v201 = vrsqrt.pop %v188
    %v202 = vmul.f32 %v201, %v188
    %v203 = vmul.f32 %v202, %v201
    %v204 = vmul.f32 0.5, %v203
    %v205 = vsub.f32 1.5, %v204
    %v206 = vmul.f32 %v201, %v205
    %vm207 = vweird.f32 %v188
    %vm208 = vweird.f32 %v201
    %vm209 = vmor %vm207, %vm208
    %v210 = vsel %vm209, %v201, %v206
    %v211 = vrsqrt.pop %v189
    %v212 = vmul.f32 %v211, %v189
    %v213 = vmul.f32 %v212, %v211
    %v214 = vmul.f32 0.5, %v213
    %v215 = vsub.f32 1.5, %v214
    %v216 = vmul.f32 %v211, %v215
    %vm217 = vweird.f32 %v189
    %vm218 = vweird.f32 %v211
    %vm219 = vmor %vm217, %vm218
    %v220 = vsel %vm219, %v211, %v216
    %v221 = vrsqrt.pop %v190
    %v222 = vmul.f32 %v221, %v190
    %v223 = vmul.f32 %v222, %v221
    %v224 = vmul.f32 0.5, %v223
    %v225 = vsub.f32 1.5, %v224
    %v226 = vmul.f32 %v221, %v225
    %vm227 = vweird.f32 %v190
    %vm228 = vweird.f32 %v221
    %vm229 = vmor %vm227, %vm228
    %v230 = vsel %vm229, %v221, %v226
    %v232 = vperm.slane %v128, 0
    %v234 = vmul.f32 %v200, %v232
    %v235 = vmul.f32 %v210, %v232
    %v236 = vmul.f32 %v220, %v232
    %v237 = vmul.f32 %v230, %v232
    %v238 = vmul.f32 %v167, %v234
    %v239 = vmul.f32 %v168, %v235
    %v240 = vmul.f32 %v169, %v236
    %v241 = vmul.f32 %v170, %v237
    %v243 = vperm.slane %v129, 0
    %v245 = vadd.f32 %v238, %v243
    %v246 = vadd.f32 %v239, %v243
    %v247 = vadd.f32 %v240, %v243
    %v248 = vadd.f32 %v241, %v243
    %249 = vst [vmem:[#allocation11] sm:$0xff] %v245
    %250 = vst [vmem:[#allocation11 + $0x8] sm:$0xff] %v246
    %251 = vst [vmem:[#allocation11 + $0x10] sm:$0xff] %v247
    %252 = vst [vmem:[#allocation11 + $0x18] sm:$0xff] %v248
    // Predicated region
    $region45: #{tpu_custom_call.1} parent=1 // pred_check
      _
    $region46: #{tpu_custom_call.1} parent=1 // pred_check_branch
      %254 = sbr.rel (0) target = $region48
    $region47: #{tpu_custom_call.1} parent=1 // pred_region
      %256 = vsyncadd [#allocation7], 0
      %s257 = sshll.u32 [#allocation11], 4
      %s258 = int_to_ptr.vmem [resolvable:$true] %s257
      %s259 = sshll.u32 %s7, 4
      %s260 = int_to_ptr.hbm [resolvable:$true] %s259
      %265 = dma.vmem_to_hbm [thread:$0]  %s258, 512, %s260, [#allocation7], 128, 128, 8
    $region48: #{tpu_custom_call.1} parent=1 // pred_fallthru
      _
    // Predicated region
    $region49: #{tpu_custom_call.1} parent=1 // pred_check
      _
    $region50: #{tpu_custom_call.1} parent=1 // pred_check_branch
      %267 = sbr.rel (0) target = $region52
    $region51: #{tpu_custom_call.1} parent=1 // pred_region
      %269 = dma.done [#allocation7], 512
    $region52: #{tpu_custom_call.1} parent=1 // pred_fallthru
      _
    %270 = vsyncpa [#allocation6], 1
    %271 = vsyncpa [#allocation9], 1
    %272 = vsyncpa [#allocation7], 1

</llo_original>
